<compile_context>
chip_gen: v5e
topology: v5e:2x2
jax: 0.10.0
libtpu: 0.0.40
codegen_flags: <defaults>
</compile_context>

<pallas_src>
import functools

import jax
import jax.numpy as jnp
from jax.experimental import pallas as pl
from jax.experimental.pallas import tpu as pltpu


def make_positional_table(max_len: int, embed_dim: int) -> jnp.ndarray:
    """Builds the (1, max_len, embed_dim) sin/cos table (same as the torch buffer)."""
    assert embed_dim % 2 == 0
    position = jnp.arange(max_len, dtype=jnp.float32)[:, None]                  # (L, 1)
    factor = jnp.power(
        10000.0, -jnp.arange(0, embed_dim, 2, dtype=jnp.float32) / embed_dim)   # (D/2,)
    angles = position * factor                                                  # (L, D/2)
    pe = jnp.zeros((max_len, embed_dim), dtype=jnp.float32)
    pe = pe.at[:, 0::2].set(jnp.sin(angles))
    pe = pe.at[:, 1::2].set(jnp.cos(angles))
    return pe[None, :, :]                                                       # (1, L, D)


def _pe_dropout_kernel(seed_ref, x_ref, pe_ref, o_ref, *,
                       p: float, tile_rows: int, n_cols: int):
    # x_ref / pe_ref / o_ref are (1, tile_rows, n_cols) VMEM tiles.
    if p >= 1.0:
        o_ref[...] = jnp.zeros(o_ref.shape, o_ref.dtype)
        return

    y = x_ref[...] + pe_ref[...]          # compute in x.dtype (no f32 up-cast)

    if p <= 0.0:
        o_ref[...] = y
        return

    # Stateless counter-based dropout: lowbias32 hash of (seed, batch, row, lane).
    # Coordinates are mixed separately (not a single flat int32 element index),
    # so there is no wrap-around correlation for tensors with > 2^31 elements.
    c = pl.program_id(0)                  # row-block index
    n = pl.program_id(1)                  # batch index
    row0 = c * tile_rows
    base = (seed_ref[0].astype(jnp.uint32) * jnp.uint32(0x9E3779B9)) ^ (
        n.astype(jnp.uint32) * jnp.uint32(0x85EBCA6B))

    def hash_bits(shape):
        r_iota = jax.lax.broadcasted_iota(jnp.int32, shape, 1)
        l_iota = jax.lax.broadcasted_iota(jnp.int32, shape, 2)
        u = (base
             ^ ((row0 + r_iota).astype(jnp.uint32) * jnp.uint32(0xC2B2AE35))
             ^ (l_iota.astype(jnp.uint32) * jnp.uint32(0x27D4EB2F)))
        # lowbias32 finalizer -> well-distributed uniform bits.
        u = (u ^ (u >> 16)) * jnp.uint32(0x7FEB352D)
        u = (u ^ (u >> 15)) * jnp.uint32(0x846CA68B)
        return u ^ (u >> 16)

    # TODO(synk): for bf16 inputs the 1/(1-p) scale is rounded to bf16 before the
    # multiply (~0.1% systematic bias); kept in x.dtype to stay on the VPU fast path.
    scale = jnp.asarray(1.0 / (1.0 - p), dtype=y.dtype)
    zero = jnp.zeros((), dtype=y.dtype)

    half = tile_rows // 2
    if tile_rows % 16 == 0:
        # One 32-bit hash serves two rows: low/high 16 bits -> two keep decisions.
        # Halves the int32 VALU work per element (the binding slot on v7x training).
        thr16 = jnp.int32(min(int(p * 65536.0), 65535))
        u = hash_bits((1, half, n_cols))
        lo = (u & jnp.uint32(0xFFFF)).astype(jnp.int32)
        hi = (u >> 16).astype(jnp.int32)
        o_ref[:, :half, :] = jnp.where(lo >= thr16, y[:, :half, :] * scale, zero)
        o_ref[:, half:, :] = jnp.where(hi >= thr16, y[:, half:, :] * scale, zero)
    else:
        # Fallback: one 31-bit decision per element (tiny / unaligned tiles).
        thr31 = jnp.int32(min(int(p * 2147483648.0), 2147483647))
        h = (hash_bits((1, tile_rows, n_cols)) & jnp.uint32(0x7FFFFFFF)).astype(jnp.int32)
        o_ref[...] = jnp.where(h >= thr31, y * scale, zero)


def _pick_tile_rows(rows: int, n_cols: int, dtype_bytes: int, n_batch: int) -> int:
    """Row-tile size: ~4 MiB per operand, packed-sublane aligned, >= ~8 grid steps."""
    # Packed sublane tile: >=16 rows (bf16 vregs hold 16 sublanes; int8/fp8 -> 32).
    sub = 8 * max(2, 4 // max(1, dtype_bytes))
    if rows <= sub:
        return rows
    target_bytes = 4 << 20
    by_bytes = max(sub, target_bytes // max(1, n_cols * dtype_bytes))
    # Keep at least ~8 total grid steps for dual-TC sharding + pipeline overlap.
    min_row_blocks = max(1, pl.cdiv(8, max(1, n_batch)))
    by_steps = max(sub, pl.cdiv(rows, min_row_blocks))
    t = (min(by_bytes, by_steps) // sub) * sub
    if t >= rows:
        return rows
    return max(t, sub)


def positional_encoding_forward(x, pe, seed, *, dropout_p=0.1, training=True):
    """x: (N, S, D); pe: (1, max_len, D); seed: int32[1]. Returns (N, S, D)."""
    N, S, D = x.shape
    p = float(dropout_p) if training else 0.0
    pe_s = jax.lax.slice(pe, (0, 0, 0), (1, S, D)).astype(x.dtype)  # glue: slice + dtype match

    # Lane-dense view: fold (S, D) into 128-wide rows whenever D itself is not
    # lane-aligned (keeps stores full-width vst instead of masked vst.msk).
    if D % 128 == 0:
        rows, cols = S, D
    elif (S * D) % 128 == 0:
        rows, cols = (S * D) // 128, 128
    else:
        rows, cols = S, D  # TODO(synk): pad D to a multiple of 128 for full-width stores
    x_v = x.reshape(N, rows, cols)
    pe_v = pe_s.reshape(1, rows, cols)

    dtype_bytes = x.dtype.itemsize
    tile_rows = _pick_tile_rows(rows, cols, dtype_bytes, N)
    n_row_blocks = pl.cdiv(rows, tile_rows)   # ragged last block is masked by Pallas

    kernel = functools.partial(
        _pe_dropout_kernel, p=p, tile_rows=tile_rows, n_cols=cols)

    cost = pl.CostEstimate(
        flops=N * S * D * (8 if p > 0.0 else 1),
        transcendentals=0,
        bytes_accessed=(2 * N * S * D + S * D) * dtype_bytes + 4,
    )

    out_v = pl.pallas_call(
        kernel,
        out_shape=jax.ShapeDtypeStruct((N, rows, cols), x.dtype),
        grid_spec=pltpu.PrefetchScalarGridSpec(
            num_scalar_prefetch=1,                 # seed lands in SMEM
            grid=(n_row_blocks, N),                # batch innermost -> pe block stays resident
            in_specs=[
                pl.BlockSpec((1, tile_rows, cols), lambda c, n, seed: (n, c, 0)),  # x
                pl.BlockSpec((1, tile_rows, cols), lambda c, n, seed: (0, c, 0)),  # pe
            ],
            out_specs=pl.BlockSpec((1, tile_rows, cols), lambda c, n, seed: (n, c, 0)),
        ),
        compiler_params=pltpu.CompilerParams(
            dimension_semantics=("parallel", "parallel"),   # stateless dropout -> shardable
            vmem_limit_bytes=48 << 20),            # 6 x ~4 MiB double-buffered tiles + headroom
        cost_estimate=cost,
    )(seed, x_v, pe_v)
    return out_v.reshape(N, S, D)


if __name__ == "__main__":
    DROPOUT = 0.1
    seed = jnp.array([0], dtype=jnp.int32)

    # Case 1: small module-like shape (N, S, D) = (2, 8, 32) -> lane-folded layout,
    # tiny tile -> per-element fallback dropout path.
    N, S, D = 2, 8, 32
    MAX_LEN = 64     # synthetic max_len (>= S); module default 5000 not needed here
    key = jax.random.PRNGKey(0)
    x = jax.random.normal(key, (N, S, D), dtype=jnp.float32)
    pe = make_positional_table(MAX_LEN, D)
    ref = x + pe[:, :S, :]

    out_eval = positional_encoding_forward(x, pe, seed, dropout_p=DROPOUT, training=False)
    out_eval = jax.block_until_ready(out_eval)
    assert out_eval.shape == (N, S, D)
    assert jnp.allclose(out_eval, ref, atol=1e-6, rtol=1e-6)

    out_train = positional_encoding_forward(x, pe, seed, dropout_p=DROPOUT, training=True)
    out_train = jax.block_until_ready(out_train)
    assert out_train.shape == (N, S, D)
    surv = out_train != 0.0
    assert jnp.allclose(
        jnp.where(surv, out_train, 0.0),
        jnp.where(surv, ref / (1.0 - DROPOUT), 0.0),
        atol=1e-5, rtol=1e-5)
    drop_frac = float(1.0 - jnp.mean(surv.astype(jnp.float32)))
    assert 0.0 < drop_frac < 0.35  # loose sanity check on the dropout rate

    # Case 2: lane-aligned shape (2, 64, 128) -> natural layout, 16-row tiles,
    # exercises the two-decisions-per-hash dropout path.
    N2, S2, D2 = 2, 64, 128
    x2 = jax.random.normal(jax.random.PRNGKey(1), (N2, S2, D2), dtype=jnp.float32)
    pe2 = make_positional_table(128, D2)
    ref2 = x2 + pe2[:, :S2, :]

    out2_eval = positional_encoding_forward(x2, pe2, seed, dropout_p=DROPOUT, training=False)
    out2_eval = jax.block_until_ready(out2_eval)
    assert jnp.allclose(out2_eval, ref2, atol=1e-6, rtol=1e-6)

    out2 = positional_encoding_forward(x2, pe2, seed, dropout_p=DROPOUT, training=True)
    out2 = jax.block_until_ready(out2)
    surv2 = out2 != 0.0
    assert jnp.allclose(
        jnp.where(surv2, out2, 0.0),
        jnp.where(surv2, ref2 / (1.0 - DROPOUT), 0.0),
        atol=1e-5, rtol=1e-5)
    drop2 = float(1.0 - jnp.mean(surv2.astype(jnp.float32)))
    assert 0.03 < drop2 < 0.2

    print("KERNEL_OK")
</pallas_src>

<mosaic_0001>
module attributes {stable_mosaic.version = 11 : i64} {
  func.func @_pe_dropout_kernel(%arg0: i32, %arg1: i32, %arg2: memref<1xi32, #tpu.memory_space<smem>>, %arg3: memref<1x2x128xf32, #tpu.memory_space<vmem>>, %arg4: memref<1x2x128xf32, #tpu.memory_space<vmem>>, %arg5: memref<1x2x128xf32, #tpu.memory_space<vmem>>) attributes {dimension_semantics = [#tpu.dimension_semantics<parallel>, #tpu.dimension_semantics<parallel>], iteration_bounds = array<i64: 1, 2>, scalar_prefetch = 1 : i64, scratch_operands = 0 : i64, tpu.core_type = #tpu.core_type<tc>, window_params = [{transform_indices = @transform_0, window_bounds = array<i64: 1, 2, 128>}, {transform_indices = @transform_1, window_bounds = array<i64: 1, 2, 128>}, {transform_indices = @transform_2, window_bounds = array<i64: 1, 2, 128>}]} {
    %c0 = arith.constant 0 : index
    %c0_0 = arith.constant 0 : index
    %c0_1 = arith.constant 0 : index
    %0 = vector.load %arg3[%c0, %c0_0, %c0_1] : memref<1x2x128xf32, #tpu.memory_space<vmem>>, vector<1x2x128xf32>
    %c0_2 = arith.constant 0 : index
    %c0_3 = arith.constant 0 : index
    %c0_4 = arith.constant 0 : index
    %1 = vector.load %arg4[%c0_2, %c0_3, %c0_4] : memref<1x2x128xf32, #tpu.memory_space<vmem>>, vector<1x2x128xf32>
    %2 = arith.addf %0, %1 : vector<1x2x128xf32>
    %c0_5 = arith.constant 0 : index
    %c0_6 = arith.constant 0 : index
    %c0_7 = arith.constant 0 : index
    %3 = vector.load %arg5[%c0_5, %c0_6, %c0_7] : memref<1x2x128xf32, #tpu.memory_space<vmem>>, vector<1x2x128xf32>
    tpu.vector_store %arg5[%c0_5, %c0_6, %c0_7], %2 {strides = array<i32>} : memref<1x2x128xf32, #tpu.memory_space<vmem>>, vector<1x2x128xf32>,
    return
  }
  func.func @transform_0(%arg0: i32, %arg1: i32, %arg2: memref<1xi32, #tpu.memory_space<smem>>) -> (i32, i32, i32) {
    %c0_i32 = arith.constant 0 : i32
    %c0_i32_0 = arith.constant 0 : i32
    return %arg1, %arg0, %c0_i32 : i32, i32, i32
  }
  func.func @transform_1(%arg0: i32, %arg1: i32, %arg2: memref<1xi32, #tpu.memory_space<smem>>) -> (i32, i32, i32) {
    %c0_i32 = arith.constant 0 : i32
    %c0_i32_0 = arith.constant 0 : i32
    %c0_i32_1 = arith.constant 0 : i32
    return %c0_i32, %arg0, %c0_i32_0 : i32, i32, i32
  }
  func.func @transform_2(%arg0: i32, %arg1: i32, %arg2: memref<1xi32, #tpu.memory_space<smem>>) -> (i32, i32, i32) {
    %c0_i32 = arith.constant 0 : i32
    %c0_i32_0 = arith.constant 0 : i32
    return %arg1, %arg0, %c0_i32 : i32, i32, i32
  }
}

</mosaic_0001>

<llo_original>
// kernel: tpu_custom_call.1
$region0: #{tpu_custom_call.1}
  #allocation0 [shape = 'u32[]', space=smem, size = 0x4, offset = 0x4, fixed_abs, tag = 'smem constant byte address 0x4 - core index']
  #allocation1 [shape = 'u32[72,128]{1,0:T(1,128)}', space=vmem, size = 0x9000, scoped, tag = 'internal scratch']
  #allocation2 [shape = 's32[1]{0}', space=sflag, size = 0x4, scoped, tag = 'scoped memory for tpu_custom_call.1']
  #allocation3 [shape = 's32[1]{0:T(128)S(6)}', space=smem, size = 0x200, scoped, tag = 'prefetched SMEM operand 0']
  %s0 = inlined_call_operand.<no memory space> [shape: s32[1], index: 0, kind: input, shape index: {}]
  %s1 = inlined_call_operand.hbm [shape: f32[2,2,128], index: 1, kind: input, shape index: {}]
  %s2 = inlined_call_operand.vmem [shape: f32[1,2,128], index: 2, kind: input, shape index: {}]
  %s3 = inlined_call_operand.hbm [shape: f32[2,2,128], index: 3, kind: output, shape index: {}]
  %s4 = sld [smem:[#allocation0]]
  $region45: #{tpu_custom_call.1} parent=0
    _
  %s6 = ssub.s32 1, %s4
  %s7 = scalar_select 0, %s6, %s4
  %8 = sst [smem:[#allocation3]] %s0
  $region1: #{tpu_custom_call.1} parent=0
    #allocation4 [shape = 'u8[2048]{0}', space=vmem, size = 0x800, scoped, tag = 'input window, operand 1']
    #allocation5 [shape = 's32[2]{0}', space=sflag, size = 0x8, scoped, tag = 'scoped memory for tpu_custom_call.1']
    #allocation6 [shape = 's32[2]{0}', space=sflag, size = 0x8, scoped, tag = 'scoped memory for tpu_custom_call.1']
    #allocation7 [shape = 'u8[2048]{0}', space=vmem, size = 0x800, scoped, tag = 'output window, operand 0']
    %9 = vsyncpa [#allocation5], 0
    %s10 = scalar_lea.sflag [#allocation5], 1
    %11 = vsyncpa %s10, 0
    %12 = vsyncpa [#allocation6], 0
    %s13 = scalar_lea.sflag [#allocation6], 1
    %14 = vsyncpa %s13, 0
    loop: start=0, step=1, limit=4
    $region2: #{tpu_custom_call.1} parent=1 // loop_pre_header
      _
    $region3: #{tpu_custom_call.1} parent=1 // loop_header
      %s16 = sphi 0, %s20
      %p17 = scmp.ge.s32.totalorder %s16, 4
      %s23 = sphi 0, %s35
      %s24 = sphi 0, %s31
      %s25 = sphi 0, %s23
      %s26 = sphi 0, %s24
      %s27 = sphi 0, %s25
      %s28 = sphi 0, %s26
      %s40 = sphi 0, %s42
      %s43 = sphi 0, %s40
      %s44 = sphi 0, %s43
      %s60 = sphi 0, %s44
      %s66 = sphi 0, %s68
      %s69 = sphi 0, %s66
      %s70 = sphi 0, %s69
      %s86 = sphi 0, %s70
      %s94 = sphi 0, %s96
      %s97 = sphi 0, %s94
      %s98 = sphi 0, %s97
      %s114 = sphi 0, %s98
    $region4: #{tpu_custom_call.1} parent=1 // loop_header_branch
      %19 = sbr.rel (%p17) target = $region8
    $region5: #{tpu_custom_call.1} parent=1 // loop_body
      %s21 = ssub.s32 %s16, 1
      %s22 = ssub.s32 %s16, 2
      %s29 = sadd.s32 1, %s24
      %p30 = scmp.ge.s32.totalorder %s29, 2
      %s31 = scalar_select %p30, 0, %s29
      %s32 = sadd.s32 1, %s23
      %s33 = scalar_select %p30, %s32, %s23
      %p34 = scmp.ge.s32.totalorder %s33, 1
      %s35 = scalar_select %p34, 0, %s33
      %s36 = ssub.s32 %s24, %s31
      %s37 = ssub.s32 %s23, %s35
      %s38 = sor.u32 %s36, %s37
      %p39 = scmp.eq.s32.totalorder %s38, 0
      %s41 = sadd.s32 %s40, 1
      %s42 = scalar_select %p39, %s40, %s41
      %p45 = pneg %p39
      %p46 = scmp.eq.s32.totalorder %s16, 1
      %p47 = por %p45, %p46
      %p48 = scmp.ne.s32.totalorder %s40, %s43
      %p49 = scmp.eq.s32.totalorder %s16, 0
      %p50 = por %p48, %p49
      %p51 = scmp.ne.s32.totalorder %s40, %s43
      %p52 = scmp.eq.s32.totalorder %s21, 1
      %p53 = por %p51, %p52
      %p54 = scmp.ne.s32.totalorder %s43, %s44
      %p55 = scmp.eq.s32.totalorder %s21, 0
      %p56 = por %p54, %p55
      %p57 = scmp.ne.s32.totalorder %s43, %s44
      %p58 = scmp.eq.s32.totalorder %s22, 1
      %p59 = por %p57, %p58
      %p61 = scmp.ne.s32.totalorder %s44, %s60
      %p62 = scmp.eq.s32.totalorder %s22, 0
      %p63 = por %p61, %p62
      %s64 = ssub.s32 %s23, %s35
      %p65 = scmp.eq.s32.totalorder %s64, 0
      %s67 = sadd.s32 %s66, 1
      %s68 = scalar_select %p65, %s66, %s67
      %p71 = pneg %p65
      %p72 = scmp.eq.s32.totalorder %s16, 1
      %p73 = por %p71, %p72
      %p74 = scmp.ne.s32.totalorder %s66, %s69
      %p75 = scmp.eq.s32.totalorder %s16, 0
      %p76 = por %p74, %p75
      %p77 = scmp.ne.s32.totalorder %s66, %s69
      %p78 = scmp.eq.s32.totalorder %s21, 1
      %p79 = por %p77, %p78
      %p80 = scmp.ne.s32.totalorder %s69, %s70
      %p81 = scmp.eq.s32.totalorder %s21, 0
      %p82 = por %p80, %p81
      %p83 = scmp.ne.s32.totalorder %s69, %s70
      %p84 = scmp.eq.s32.totalorder %s22, 1
      %p85 = por %p83, %p84
      %p87 = scmp.ne.s32.totalorder %s70, %s86
      %p88 = scmp.eq.s32.totalorder %s22, 0
      %p89 = por %p87, %p88
      %s90 = ssub.s32 %s24, %s31
      %s91 = ssub.s32 %s23, %s35
      %s92 = sor.u32 %s90, %s91
      %p93 = scmp.eq.s32.totalorder %s92, 0
      %s95 = sadd.s32 %s94, 1
      %s96 = scalar_select %p93, %s94, %s95
      %p99 = pneg %p93
      %p100 = scmp.eq.s32.totalorder %s16, 1
      %p101 = por %p99, %p100
      %p102 = scmp.ne.s32.totalorder %s94, %s97
      %p103 = scmp.eq.s32.totalorder %s16, 0
      %p104 = por %p102, %p103
      %p105 = scmp.ne.s32.totalorder %s94, %s97
      %p106 = scmp.eq.s32.totalorder %s21, 1
      %p107 = por %p105, %p106
      %p108 = scmp.ne.s32.totalorder %s97, %s98
      %p109 = scmp.eq.s32.totalorder %s21, 0
      %p110 = por %p108, %p109
      %p111 = scmp.ne.s32.totalorder %s97, %s98
      %p112 = scmp.eq.s32.totalorder %s22, 1
      %p113 = por %p111, %p112
      %p115 = scmp.ne.s32.totalorder %s98, %s114
      %p116 = scmp.eq.s32.totalorder %s22, 0
      %p117 = por %p115, %p116
      %p118 = scmp.le.s32.totalorder 1, %s16
      %p119 = scmp.lt.s32.totalorder %s16, 3
      %p120 = pnand %p118, %p119
      %p121 = pneg %p120
      // Predicated region
      $region9: #{tpu_custom_call.1} parent=5 // pred_check
        _
      $region10: #{tpu_custom_call.1} parent=5 // pred_check_branch
        %123 = sbr.rel (%p120) target = $region12
      $region11: #{tpu_custom_call.1} parent=5 // pred_region
        %s124 = ssub.s32 %s16, 1
        // Predicated region
        $region13: #{tpu_custom_call.1} parent=11 // pred_check
          %p125 = pneg %p82
        $region14: #{tpu_custom_call.1} parent=11 // pred_check_branch
          %127 = sbr.rel (%p125) target = $region16
        $region15: #{tpu_custom_call.1} parent=11 // pred_region
          %p128 = scmp.lt.s32.totalorder %s25, 0
          %s129 = scalar_select %p128, %s25, 0
          %s130 = smul.addr %s129, 2
          %s131 = scalar_lea.vmem %s2, %s130
        $region16: #{tpu_custom_call.1} parent=11 // pred_fallthru
          _
      $region12: #{tpu_custom_call.1} parent=5 // pred_fallthru
        _
      %p132 = scmp.lt.s32.totalorder %s16, 2
      // Predicated region
      $region17: #{tpu_custom_call.1} parent=5 // pred_check
        %p133 = pneg %p132
      $region18: #{tpu_custom_call.1} parent=5 // pred_check_branch
        %135 = sbr.rel (%p133) target = $region20
      $region19: #{tpu_custom_call.1} parent=5 // pred_region
        // Predicated region
        $region21: #{tpu_custom_call.1} parent=19 // pred_check
          %p136 = pneg %p50
        $region22: #{tpu_custom_call.1} parent=19 // pred_check_branch
          %138 = sbr.rel (%p136) target = $region24
        $region23: #{tpu_custom_call.1} parent=19 // pred_region
          %s139 = sand.u32 %s40, 1
          %s140 = scalar_lea.sflag [#allocation5], %s139
          %s141 = sand.u32 %s40, 1
          %s142 = smul.addr %s141, 2
          %s143 = scalar_lea.vmem [#allocation4], %s142
          %145 = vsyncadd %s140, 0
          %s146 = sadd.s32 %s23, %s24
          %s147 = smul.addr %s146, 2
          %s148 = scalar_lea.hbm %s1, %s147
          %s150 = sshll.u32 %s148, 4
          %s151 = int_to_ptr.hbm [resolvable:$true] %s150
          %s152 = sshll.u32 %s143, 4
          %s153 = int_to_ptr.vmem [resolvable:$true] %s152
          %155 = dma.hbm_to_vmem [thread:$0]  %s151, 32, %s153, %s140
        $region24: #{tpu_custom_call.1} parent=19 // pred_fallthru
          _
      $region20: #{tpu_custom_call.1} parent=5 // pred_fallthru
        _
      %p156 = scmp.le.s32.totalorder 1, %s16
      %p157 = scmp.lt.s32.totalorder %s16, 3
      %p158 = pnand %p156, %p157
      %p159 = pneg %p158
      // Predicated region
      $region25: #{tpu_custom_call.1} parent=5 // pred_check
        _
      $region26: #{tpu_custom_call.1} parent=5 // pred_check_branch
        %161 = sbr.rel (%p158) target = $region28
      $region27: #{tpu_custom_call.1} parent=5 // pred_region
        %s162 = ssub.s32 %s16, 1
        %s163 = sand.u32 %s43, 1
        %s164 = scalar_lea.sflag [#allocation5], %s163
        %s165 = sand.u32 %s43, 1
        %s166 = smul.addr %s165, 2
        %s167 = scalar_lea.vmem [#allocation4], %s166
        // Predicated region
        $region29: #{tpu_custom_call.1} parent=27 // pred_check
          %p168 = pneg %p56
        $region30: #{tpu_custom_call.1} parent=27 // pred_check_branch
          %170 = sbr.rel (%p168) target = $region32
        $region31: #{tpu_custom_call.1} parent=27 // pred_region
          %172 = dma.done %s164, 32
        $region32: #{tpu_custom_call.1} parent=27 // pred_fallthru
          _
        %s173 = sand.u32 %s43, 1
        %s174 = scalar_lea.sflag [#allocation5], %s173
        %s175 = sand.u32 %s43, 1
        %s176 = smul.addr %s175, 2
        %s177 = scalar_lea.vmem [#allocation4], %s176
        %p178 = pneg %p56
        %p179 = pneg %p53
        %p180 = scmp.lt.s32.totalorder %s25, 0
        %s181 = scalar_select %p180, %s25, 0
        %s182 = smul.addr %s181, 2
        %s183 = scalar_lea.vmem %s2, %s182
        %p184 = pneg %p82
        %p185 = pneg %p79
        %p186 = pneg %p110
        %p187 = pneg %p107
        %s188 = sand.u32 %s97, 1
        %s189 = scalar_lea.sflag [#allocation6], %s188
        %s190 = sand.u32 %s97, 1
        %s191 = smul.addr %s190, 2
        %s192 = scalar_lea.vmem [#allocation7], %s191
        %p193 = scmp.lt.s32.totalorder %s25, 0
        %s194 = scalar_select %p193, %s25, 0
        %s195 = smul.addr %s194, 2
        %s196 = scalar_lea.vmem %s2, %s195
        %v197 = vld [vmem:[%s167] sm:$0x3]
        %v198 = vld [vmem:[%s196] sm:$0x3]
        %v199 = vadd.f32 %v197, %v198
        %200 = vst [vmem:[%s192] sm:$0x3] %v199
        %s201 = sand.u32 %s97, 1
        %s202 = scalar_lea.sflag [#allocation6], %s201
        %s203 = sand.u32 %s97, 1
        %s204 = smul.addr %s203, 2
        %s205 = scalar_lea.vmem [#allocation7], %s204
        // Predicated region
        $region33: #{tpu_custom_call.1} parent=27 // pred_check
          %p206 = pneg %p107
        $region34: #{tpu_custom_call.1} parent=27 // pred_check_branch
          %208 = sbr.rel (%p206) target = $region36
        $region35: #{tpu_custom_call.1} parent=27 // pred_region
          %210 = vsyncadd %s202, 0
          %s211 = sadd.s32 %s25, %s26
          %s212 = smul.addr %s211, 2
          %s213 = scalar_lea.hbm %s3, %s212
          %s215 = sshll.u32 %s205, 4
          %s216 = int_to_ptr.vmem [resolvable:$true] %s215
          %s217 = sshll.u32 %s213, 4
          %s218 = int_to_ptr.hbm [resolvable:$true] %s217
          %220 = dma.vmem_to_hbm [thread:$0]  %s216, 32, %s218, %s202
        $region36: #{tpu_custom_call.1} parent=27 // pred_fallthru
          _
      $region28: #{tpu_custom_call.1} parent=5 // pred_fallthru
        _
      %p221 = scmp.le.s32.totalorder 2, %s16
      // Predicated region
      $region37: #{tpu_custom_call.1} parent=5 // pred_check
        %p222 = pneg %p221
      $region38: #{tpu_custom_call.1} parent=5 // pred_check_branch
        %224 = sbr.rel (%p222) target = $region40
      $region39: #{tpu_custom_call.1} parent=5 // pred_region
        %s225 = ssub.s32 %s16, 2
        // Predicated region
        $region41: #{tpu_custom_call.1} parent=39 // pred_check
          %p226 = pneg %p113
        $region42: #{tpu_custom_call.1} parent=39 // pred_check_branch
          %228 = sbr.rel (%p226) target = $region44
        $region43: #{tpu_custom_call.1} parent=39 // pred_region
          %s229 = sand.u32 %s98, 1
          %s230 = scalar_lea.sflag [#allocation6], %s229
          %s231 = sand.u32 %s98, 1
          %s232 = smul.addr %s231, 2
          %s233 = scalar_lea.vmem [#allocation7], %s232
          %235 = dma.done %s230, 32
        $region44: #{tpu_custom_call.1} parent=39 // pred_fallthru
          _
      $region40: #{tpu_custom_call.1} parent=5 // pred_fallthru
        _
    $region6: #{tpu_custom_call.1} parent=1 // loop_footer
      %s20 = sadd.s32 1, %s16
    $region7: #{tpu_custom_call.1} parent=1 // loop_footer_branch
      %15 = sbr.rel target = $region3
    $region8: #{tpu_custom_call.1} parent=1 // loop_exit
      _
    %236 = vsyncpa [#allocation5], 1
    %s237 = scalar_lea.sflag [#allocation5], 1
    %238 = vsyncpa %s237, 1
    %239 = vsyncpa [#allocation6], 1
    %s240 = scalar_lea.sflag [#allocation6], 1
    %241 = vsyncpa %s240, 1

</llo_original>
